<compile_context>
chip_gen: v7x
topology: tpu7x:2x2x1
jax: 0.10.0
libtpu: 0.0.40
codegen_flags: <defaults>
</compile_context>

<pallas_src>
import jax
import jax.numpy as jnp
import numpy as np
from jax.experimental import pallas as pl
from jax.experimental.pallas import tpu as pltpu

_EPS = 1e-5


def make_residual_kernel(use_1x1conv, L, n_valid):
    """Fused residual-block kernel in the lane-dense (C, N*L) layout."""

    def kernel(x_ref, w1_ref, g1_ref, be1_ref, w2_ref, g2_ref, be2_ref, *rest):
        if use_1x1conv:
            w3_ref, b3_ref, out_ref, taps1, taps2 = rest
        else:
            out_ref, taps1, taps2 = rest

        nlp = x_ref.shape[1]                       # padded N*L (multiple of 128)
        inv_count = 1.0 / float(n_valid)           # true N*L count for BN stats

        # Per-lane position within a sample.  Used for:
        #   * the conv padding=1 edge masks (and to keep sample boundaries from
        #     leaking across the flattened N*L axis after the lane roll),
        #   * excluding the lane padding from the BatchNorm statistics.
        pos = jax.lax.broadcasted_iota(jnp.int32, (1, nlp), 1)
        l_pos = pos % L
        not_first = (l_pos != 0).astype(x_ref.dtype)        # (1, nlp)
        not_last = (l_pos != (L - 1)).astype(x_ref.dtype)   # (1, nlp)

        def stage_taps(scr, a):
            # a: (C, nlp) activation in scr.dtype.  Fill scr (3C, nlp) with the
            # tap-major stack [x[l-1], x[l], x[l+1]] via XLU lane rolls + edge
            # masks (conv zero padding / sample-boundary isolation).
            c = a.shape[0]
            scr[0:c, :] = pltpu.roll(a, 1, axis=1) * not_first        # left tap
            scr[c:2 * c, :] = a                                        # center tap
            scr[2 * c:3 * c, :] = pltpu.roll(a, nlp - 1, axis=1) * not_last  # right

        def bn_fold(y, g_ref, be_ref):
            # PyTorch training-mode BN (biased batch variance, eps=1e-5), folded
            # into a single per-channel (scale, shift) pair.  Single-pass stats.
            if nlp != n_valid:
                ym = y * (pos < n_valid).astype(jnp.float32)
            else:
                ym = y
            s = jnp.sum(ym, axis=1, keepdims=True)                     # (Co, 1)
            ss = jnp.sum(ym * ym, axis=1, keepdims=True)
            mean = s * inv_count
            var = jnp.maximum(ss * inv_count - mean * mean, 0.0)       # clamp >= 0
            scale = jax.lax.rsqrt(var + _EPS) * g_ref[...]
            shift = be_ref[...] - mean * scale
            return scale, shift

        # conv1 -> bn1 -> relu   (conv bias is absorbed by BN's mean subtraction)
        stage_taps(taps1, x_ref[...])
        y1 = jnp.dot(w1_ref[...], taps1[...], preferred_element_type=jnp.float32)
        sc1, sh1 = bn_fold(y1, g1_ref, be1_ref)
        a1 = jnp.maximum(y1 * sc1 + sh1, 0.0)                          # (Cout, nlp)

        # conv2 -> bn2
        stage_taps(taps2, a1.astype(taps2.dtype))
        y2 = jnp.dot(w2_ref[...], taps2[...], preferred_element_type=jnp.float32)
        sc2, sh2 = bn_fold(y2, g2_ref, be2_ref)

        # Residual branch: identity or 1x1-conv projection (one 2D matmul).
        if use_1x1conv:
            xres = jnp.dot(w3_ref[...], x_ref[...],
                           preferred_element_type=jnp.float32) + b3_ref[...]
        else:
            xres = x_ref[...].astype(jnp.float32)

        # bn2 fold + residual add + final ReLU fused into one expression.
        out_ref[...] = jnp.maximum(y2 * sc2 + (sh2 + xres), 0.0).astype(out_ref.dtype)

    return kernel


def residual_forward(x_ncl, params, use_1x1conv):
    """x_ncl: (N, Cin, L) in the PyTorch layout; returns (N, Cout, L)."""
    N, Cin, L = x_ncl.shape
    Cout = params["w1"].shape[0]
    if not use_1x1conv and Cin != Cout:
        raise ValueError("identity residual requires Cin == Cout")

    NL = N * L
    NLp = ((NL + 127) // 128) * 128    # lane-dense: pad N*L up to a multiple of 128

    # Lane-dense activation layout: channels on sublanes, flattened N*L on lanes.
    x_cnl = jnp.transpose(x_ncl, (1, 0, 2)).reshape(Cin, NL)
    if NLp != NL:
        x_cnl = jnp.pad(x_cnl, ((0, 0), (0, NLp - NL)))

    # Fold the 3 conv taps into the contraction dim on the host, tap-major to match
    # the in-kernel tap stacking: (Co, Ci, 3) -> (Co, 3*Ci).
    w1f = jnp.transpose(params["w1"], (0, 2, 1)).reshape(Cout, 3 * Cin)
    w2f = jnp.transpose(params["w2"], (0, 2, 1)).reshape(Cout, 3 * Cout)
    col = lambda v: v.reshape(-1, 1)

    args = [x_cnl,
            w1f, col(params["g1"]), col(params["be1"]),
            w2f, col(params["g2"]), col(params["be2"])]
    if use_1x1conv:
        args += [params["w3"], col(params["b3"])]

    # Footprint-derived VMEM budget (x + tap scratches + output + f32 intermediates),
    # with 2x headroom; clamped to 48 MiB so the same plan fits v7x's 64 MiB VMEM.
    itemsize = x_ncl.dtype.itemsize
    footprint = NLp * (itemsize * (4 * Cin + 4 * Cout) + 4 * 6 * Cout)
    vmem_limit = int(min(max(2 * footprint, 16 << 20), 48 << 20))

    out = pl.pallas_call(
        make_residual_kernel(use_1x1conv, L, NL),
        out_shape=jax.ShapeDtypeStruct((Cout, NLp), x_ncl.dtype),
        in_specs=[pl.BlockSpec(memory_space=pltpu.MemorySpace.VMEM)] * len(args),
        out_specs=pl.BlockSpec(memory_space=pltpu.MemorySpace.VMEM),
        scratch_shapes=[pltpu.VMEM((3 * Cin, NLp), x_ncl.dtype),    # conv1 tap stack
                        pltpu.VMEM((3 * Cout, NLp), x_ncl.dtype)],  # conv2 tap stack
        compiler_params=pltpu.CompilerParams(vmem_limit_bytes=vmem_limit),
    )(*args)

    # Back to the PyTorch (N, Cout, L) layout (wrapper-side layout plumbing).
    return jnp.transpose(out[:, :NL].reshape(Cout, N, L), (1, 0, 2))


# ------------------------- pure-JAX reference (PyTorch semantics) ------------
def residual_reference(x, p, use_1x1conv):
    def conv1d(x, w_oik, b, pad):
        y = jax.lax.conv_general_dilated(
            x, w_oik, window_strides=(1,), padding=[(pad, pad)],
            dimension_numbers=("NCH", "OIH", "NCH"))
        return y + b[None, :, None]

    def bn(y, g, b):
        mean = jnp.mean(y, axis=(0, 2), keepdims=True)
        var = jnp.mean((y - mean) ** 2, axis=(0, 2), keepdims=True)
        return (y - mean) / jnp.sqrt(var + _EPS) * g[None, :, None] + b[None, :, None]

    Y = jax.nn.relu(bn(conv1d(x, p["w1"], p["b1"], 1), p["g1"], p["be1"]))
    Y = bn(conv1d(Y, p["w2"], p["b2"], 1), p["g2"], p["be2"])
    X = x
    if use_1x1conv:
        X = jnp.einsum("oi,nil->nol", p["w3"], x) + p["b3"][None, :, None]
    return jax.nn.relu(Y + X)


def init_params(key, cin, cout, use_1x1conv):
    ks = jax.random.split(key, 10)
    p = {
        "w1": 0.2 * jax.random.normal(ks[0], (cout, cin, 3), jnp.float32),
        "b1": 0.1 * jax.random.normal(ks[1], (cout,), jnp.float32),
        "g1": 1.0 + 0.1 * jax.random.normal(ks[2], (cout,), jnp.float32),
        "be1": 0.1 * jax.random.normal(ks[3], (cout,), jnp.float32),
        "w2": 0.2 * jax.random.normal(ks[4], (cout, cout, 3), jnp.float32),
        "b2": 0.1 * jax.random.normal(ks[5], (cout,), jnp.float32),
        "g2": 1.0 + 0.1 * jax.random.normal(ks[6], (cout,), jnp.float32),
        "be2": 0.1 * jax.random.normal(ks[7], (cout,), jnp.float32),
    }
    if use_1x1conv:
        p["w3"] = 0.2 * jax.random.normal(ks[8], (cout, cin), jnp.float32)
        p["b3"] = 0.1 * jax.random.normal(ks[9], (cout,), jnp.float32)
    return p


if __name__ == "__main__":
    key = jax.random.PRNGKey(0)
    kx, kp1, kp2 = jax.random.split(key, 3)

    # Case 1: default module config (use_1x1conv=False, strides=1), Cin == Cout.
    x = jax.random.normal(kx, (2, 4, 16), jnp.float32)   # (N, C, L) like PyTorch
    p1 = init_params(kp1, cin=4, cout=4, use_1x1conv=False)
    out1 = residual_forward(x, p1, use_1x1conv=False)
    jax.block_until_ready(out1)
    ref1 = residual_reference(x, p1, use_1x1conv=False)
    np.testing.assert_allclose(np.asarray(out1), np.asarray(ref1), rtol=1e-4, atol=1e-4)

    # Case 2: use_1x1conv=True projection branch, Cin=4 -> Cout=8.
    p2 = init_params(kp2, cin=4, cout=8, use_1x1conv=True)
    out2 = residual_forward(x, p2, use_1x1conv=True)
    jax.block_until_ready(out2)
    ref2 = residual_reference(x, p2, use_1x1conv=True)
    np.testing.assert_allclose(np.asarray(out2), np.asarray(ref2), rtol=1e-4, atol=1e-4)

    print("KERNEL_OK")
</pallas_src>

<mosaic_0001>
module attributes {stable_mosaic.version = 11 : i64} {
  func.func @kernel(%arg0: memref<4x128xf32, #tpu.memory_space<vmem>>, %arg1: memref<4x12xf32, #tpu.memory_space<vmem>>, %arg2: memref<4x1xf32, #tpu.memory_space<vmem>>, %arg3: memref<4x1xf32, #tpu.memory_space<vmem>>, %arg4: memref<4x12xf32, #tpu.memory_space<vmem>>, %arg5: memref<4x1xf32, #tpu.memory_space<vmem>>, %arg6: memref<4x1xf32, #tpu.memory_space<vmem>>, %arg7: memref<4x128xf32, #tpu.memory_space<vmem>>, %arg8: memref<12x128xf32, #tpu.memory_space<vmem>>, %arg9: memref<12x128xf32, #tpu.memory_space<vmem>>) attributes {dimension_semantics = [], scalar_prefetch = 0 : i64, scratch_operands = 2 : i64, tpu.core_type = #tpu.core_type<tc>} {
    %0 = tpu.iota {dimensions = array<i32: 1>} : vector<1x128xi32>
    %c16_i32 = arith.constant 16 : i32
    %c0_i32 = arith.constant 0 : i32
    %1 = arith.cmpi eq, %c16_i32, %c0_i32 : i32
    %c1_i32 = arith.constant 1 : i32
    %2 = arith.select %1, %c1_i32, %c16_i32 : i32
    %3 = vector.broadcast %2 : i32 to vector<1x128xi32>
    %4 = arith.remsi %0, %3 : vector<1x128xi32>
    %c0_i32_0 = arith.constant 0 : i32
    %5 = vector.broadcast %c0_i32_0 : i32 to vector<1x128xi32>
    %6 = arith.cmpi ne, %4, %5 : vector<1x128xi32>
    %c0_i32_1 = arith.constant 0 : i32
    %7 = vector.broadcast %c0_i32_1 : i32 to vector<1x128xi32>
    %8 = arith.cmpi slt, %4, %7 : vector<1x128xi32>
    %c0_i32_2 = arith.constant 0 : i32
    %9 = arith.cmpi slt, %2, %c0_i32_2 : i32
    %10 = vector.broadcast %9 : i1 to vector<1x128xi1>
    %11 = vector.broadcast %10 : vector<1x128xi1> to vector<1x128xi1>
    %12 = arith.xori %8, %11 : vector<1x128xi1>
    %13 = arith.andi %12, %6 : vector<1x128xi1>
    %14 = vector.broadcast %2 : i32 to vector<1x128xi32>
    %15 = arith.addi %4, %14 : vector<1x128xi32>
    %16 = arith.select %13, %15, %4 : vector<1x128xi1>, vector<1x128xi32>
    %c0_i32_3 = arith.constant 0 : i32
    %17 = vector.broadcast %c0_i32_3 : i32 to vector<1x128xi32>
    %18 = arith.cmpi ne, %16, %17 : vector<1x128xi32>
    %19 = arith.extui %18 : vector<1x128xi1> to vector<1x128xi32>
    %20 = arith.sitofp %19 : vector<1x128xi32> to vector<1x128xf32>
    %c15_i32 = arith.constant 15 : i32
    %21 = vector.broadcast %c15_i32 : i32 to vector<1x128xi32>
    %22 = arith.cmpi ne, %16, %21 : vector<1x128xi32>
    %23 = arith.extui %22 : vector<1x128xi1> to vector<1x128xi32>
    %24 = arith.sitofp %23 : vector<1x128xi32> to vector<1x128xf32>
    %c0 = arith.constant 0 : index
    %c0_4 = arith.constant 0 : index
    %25 = vector.load %arg0[%c0, %c0_4] : memref<4x128xf32, #tpu.memory_space<vmem>>, vector<4x128xf32>
    %c1_i32_5 = arith.constant 1 : i32
    %26 = tpu.dynamic_rotate %25 by %c1_i32_5 dim 1 : vector<4x128xf32>, i32 -> vector<4x128xf32>
    %27 = vector.broadcast %20 : vector<1x128xf32> to vector<4x128xf32>
    %28 = arith.mulf %26, %27 : vector<4x128xf32>
    %c0_6 = arith.constant 0 : index
    %c0_7 = arith.constant 0 : index
    %29 = vector.load %arg8[%c0_6, %c0_7] : memref<12x128xf32, #tpu.memory_space<vmem>>, vector<4x128xf32>
    tpu.vector_store %arg8[%c0_6, %c0_7], %28 {strides = array<i32>} : memref<12x128xf32, #tpu.memory_space<vmem>>, vector<4x128xf32>,
    %c4 = arith.constant 4 : index
    %c0_8 = arith.constant 0 : index
    %30 = vector.load %arg8[%c4, %c0_8] : memref<12x128xf32, #tpu.memory_space<vmem>>, vector<4x128xf32>
    tpu.vector_store %arg8[%c4, %c0_8], %25 {strides = array<i32>} : memref<12x128xf32, #tpu.memory_space<vmem>>, vector<4x128xf32>,
    %c127_i32 = arith.constant 127 : i32
    %31 = tpu.dynamic_rotate %25 by %c127_i32 dim 1 : vector<4x128xf32>, i32 -> vector<4x128xf32>
    %32 = vector.broadcast %24 : vector<1x128xf32> to vector<4x128xf32>
    %33 = arith.mulf %31, %32 : vector<4x128xf32>
    %c8 = arith.constant 8 : index
    %c0_9 = arith.constant 0 : index
    %34 = vector.load %arg8[%c8, %c0_9] : memref<12x128xf32, #tpu.memory_space<vmem>>, vector<4x128xf32>
    tpu.vector_store %arg8[%c8, %c0_9], %33 {strides = array<i32>} : memref<12x128xf32, #tpu.memory_space<vmem>>, vector<4x128xf32>,
    %c0_10 = arith.constant 0 : index
    %c0_11 = arith.constant 0 : index
    %35 = vector.load %arg1[%c0_10, %c0_11] : memref<4x12xf32, #tpu.memory_space<vmem>>, vector<4x12xf32>
    %c0_12 = arith.constant 0 : index
    %c0_13 = arith.constant 0 : index
    %36 = vector.load %arg8[%c0_12, %c0_13] : memref<12x128xf32, #tpu.memory_space<vmem>>, vector<12x128xf32>
    %cst = arith.constant dense<0.000000e+00> : vector<4x128xf32>
    %37 = tpu.matmul %35, %36, %cst {dimension_numbers = #tpu.dot_dimension_numbers<[1], [0], [0], [1], [0, 0, 1, 1], [], []>} : vector<4x12xf32>, vector<12x128xf32>, vector<4x128xf32> -> vector<4x128xf32>
    %c32_i32 = arith.constant 32 : i32
    %38 = vector.broadcast %c32_i32 : i32 to vector<1x128xi32>
    %39 = arith.cmpi slt, %0, %38 : vector<1x128xi32>
    %40 = arith.extui %39 : vector<1x128xi1> to vector<1x128xi32>
    %41 = arith.sitofp %40 : vector<1x128xi32> to vector<1x128xf32>
    %42 = vector.broadcast %41 : vector<1x128xf32> to vector<4x128xf32>
    %43 = arith.mulf %37, %42 : vector<4x128xf32>
    %cst_14 = arith.constant dense<0.000000e+00> : vector<4xf32>
    %44 = vector.multi_reduction <add>, %43, %cst_14 [1] : vector<4x128xf32> to vector<4xf32>
    %45 = vector.shape_cast %44 : vector<4xf32> to vector<4x1xf32>
    %46 = arith.mulf %43, %43 : vector<4x128xf32>
    %cst_15 = arith.constant dense<0.000000e+00> : vector<4xf32>
    %47 = vector.multi_reduction <add>, %46, %cst_15 [1] : vector<4x128xf32> to vector<4xf32>
    %48 = vector.shape_cast %47 : vector<4xf32> to vector<4x1xf32>
    %cst_16 = arith.constant 3.125000e-02 : f32
    %49 = vector.broadcast %cst_16 : f32 to vector<4x1xf32>
    %50 = arith.mulf %45, %49 : vector<4x1xf32>
    %cst_17 = arith.constant 3.125000e-02 : f32
    %51 = vector.broadcast %cst_17 : f32 to vector<4x1xf32>
    %52 = arith.mulf %48, %51 : vector<4x1xf32>
    %53 = arith.mulf %50, %50 : vector<4x1xf32>
    %54 = arith.subf %52, %53 : vector<4x1xf32>
    %cst_18 = arith.constant 0.000000e+00 : f32
    %55 = vector.broadcast %cst_18 : f32 to vector<4x1xf32>
    %56 = arith.maximumf %54, %55 : vector<4x1xf32>
    %cst_19 = arith.constant 9.99999974E-6 : f32
    %57 = vector.broadcast %cst_19 : f32 to vector<4x1xf32>
    %58 = arith.addf %56, %57 : vector<4x1xf32>
    %59 = math.rsqrt %58 : vector<4x1xf32>
    %c0_20 = arith.constant 0 : index
    %c0_21 = arith.constant 0 : index
    %60 = vector.load %arg2[%c0_20, %c0_21] : memref<4x1xf32, #tpu.memory_space<vmem>>, vector<4x1xf32>
    %61 = arith.mulf %59, %60 : vector<4x1xf32>
    %c0_22 = arith.constant 0 : index
    %c0_23 = arith.constant 0 : index
    %62 = vector.load %arg3[%c0_22, %c0_23] : memref<4x1xf32, #tpu.memory_space<vmem>>, vector<4x1xf32>
    %63 = arith.mulf %50, %61 : vector<4x1xf32>
    %64 = arith.subf %62, %63 : vector<4x1xf32>
    %65 = vector.broadcast %61 : vector<4x1xf32> to vector<4x128xf32>
    %66 = arith.mulf %37, %65 : vector<4x128xf32>
    %67 = vector.broadcast %64 : vector<4x1xf32> to vector<4x128xf32>
    %68 = arith.addf %66, %67 : vector<4x128xf32>
    %cst_24 = arith.constant 0.000000e+00 : f32
    %69 = vector.broadcast %cst_24 : f32 to vector<4x128xf32>
    %70 = arith.maximumf %68, %69 : vector<4x128xf32>
    %c1_i32_25 = arith.constant 1 : i32
    %71 = tpu.dynamic_rotate %70 by %c1_i32_25 dim 1 : vector<4x128xf32>, i32 -> vector<4x128xf32>
    %72 = vector.broadcast %20 : vector<1x128xf32> to vector<4x128xf32>
    %73 = arith.mulf %71, %72 : vector<4x128xf32>
    %c0_26 = arith.constant 0 : index
    %c0_27 = arith.constant 0 : index
    %74 = vector.load %arg9[%c0_26, %c0_27] : memref<12x128xf32, #tpu.memory_space<vmem>>, vector<4x128xf32>
    tpu.vector_store %arg9[%c0_26, %c0_27], %73 {strides = array<i32>} : memref<12x128xf32, #tpu.memory_space<vmem>>, vector<4x128xf32>,
    %c4_28 = arith.constant 4 : index
    %c0_29 = arith.constant 0 : index
    %75 = vector.load %arg9[%c4_28, %c0_29] : memref<12x128xf32, #tpu.memory_space<vmem>>, vector<4x128xf32>
    tpu.vector_store %arg9[%c4_28, %c0_29], %70 {strides = array<i32>} : memref<12x128xf32, #tpu.memory_space<vmem>>, vector<4x128xf32>,
    %c127_i32_30 = arith.constant 127 : i32
    %76 = tpu.dynamic_rotate %70 by %c127_i32_30 dim 1 : vector<4x128xf32>, i32 -> vector<4x128xf32>
    %77 = vector.broadcast %24 : vector<1x128xf32> to vector<4x128xf32>
    %78 = arith.mulf %76, %77 : vector<4x128xf32>
    %c8_31 = arith.constant 8 : index
    %c0_32 = arith.constant 0 : index
    %79 = vector.load %arg9[%c8_31, %c0_32] : memref<12x128xf32, #tpu.memory_space<vmem>>, vector<4x128xf32>
    tpu.vector_store %arg9[%c8_31, %c0_32], %78 {strides = array<i32>} : memref<12x128xf32, #tpu.memory_space<vmem>>, vector<4x128xf32>,
    %c0_33 = arith.constant 0 : index
    %c0_34 = arith.constant 0 : index
    %80 = vector.load %arg4[%c0_33, %c0_34] : memref<4x12xf32, #tpu.memory_space<vmem>>, vector<4x12xf32>
    %c0_35 = arith.constant 0 : index
    %c0_36 = arith.constant 0 : index
    %81 = vector.load %arg9[%c0_35, %c0_36] : memref<12x128xf32, #tpu.memory_space<vmem>>, vector<12x128xf32>
    %cst_37 = arith.constant dense<0.000000e+00> : vector<4x128xf32>
    %82 = tpu.matmul %80, %81, %cst_37 {dimension_numbers = #tpu.dot_dimension_numbers<[1], [0], [0], [1], [0, 0, 1, 1], [], []>} : vector<4x12xf32>, vector<12x128xf32>, vector<4x128xf32> -> vector<4x128xf32>
    %c32_i32_38 = arith.constant 32 : i32
    %83 = vector.broadcast %c32_i32_38 : i32 to vector<1x128xi32>
    %84 = arith.cmpi slt, %0, %83 : vector<1x128xi32>
    %85 = arith.extui %84 : vector<1x128xi1> to vector<1x128xi32>
    %86 = arith.sitofp %85 : vector<1x128xi32> to vector<1x128xf32>
    %87 = vector.broadcast %86 : vector<1x128xf32> to vector<4x128xf32>
    %88 = arith.mulf %82, %87 : vector<4x128xf32>
    %cst_39 = arith.constant dense<0.000000e+00> : vector<4xf32>
    %89 = vector.multi_reduction <add>, %88, %cst_39 [1] : vector<4x128xf32> to vector<4xf32>
    %90 = vector.shape_cast %89 : vector<4xf32> to vector<4x1xf32>
    %91 = arith.mulf %88, %88 : vector<4x128xf32>
    %cst_40 = arith.constant dense<0.000000e+00> : vector<4xf32>
    %92 = vector.multi_reduction <add>, %91, %cst_40 [1] : vector<4x128xf32> to vector<4xf32>
    %93 = vector.shape_cast %92 : vector<4xf32> to vector<4x1xf32>
    %cst_41 = arith.constant 3.125000e-02 : f32
    %94 = vector.broadcast %cst_41 : f32 to vector<4x1xf32>
    %95 = arith.mulf %90, %94 : vector<4x1xf32>
    %cst_42 = arith.constant 3.125000e-02 : f32
    %96 = vector.broadcast %cst_42 : f32 to vector<4x1xf32>
    %97 = arith.mulf %93, %96 : vector<4x1xf32>
    %98 = arith.mulf %95, %95 : vector<4x1xf32>
    %99 = arith.subf %97, %98 : vector<4x1xf32>
    %cst_43 = arith.constant 0.000000e+00 : f32
    %100 = vector.broadcast %cst_43 : f32 to vector<4x1xf32>
    %101 = arith.maximumf %99, %100 : vector<4x1xf32>
    %cst_44 = arith.constant 9.99999974E-6 : f32
    %102 = vector.broadcast %cst_44 : f32 to vector<4x1xf32>
    %103 = arith.addf %101, %102 : vector<4x1xf32>
    %104 = math.rsqrt %103 : vector<4x1xf32>
    %c0_45 = arith.constant 0 : index
    %c0_46 = arith.constant 0 : index
    %105 = vector.load %arg5[%c0_45, %c0_46] : memref<4x1xf32, #tpu.memory_space<vmem>>, vector<4x1xf32>
    %106 = arith.mulf %104, %105 : vector<4x1xf32>
    %c0_47 = arith.constant 0 : index
    %c0_48 = arith.constant 0 : index
    %107 = vector.load %arg6[%c0_47, %c0_48] : memref<4x1xf32, #tpu.memory_space<vmem>>, vector<4x1xf32>
    %108 = arith.mulf %95, %106 : vector<4x1xf32>
    %109 = arith.subf %107, %108 : vector<4x1xf32>
    %c0_49 = arith.constant 0 : index
    %c0_50 = arith.constant 0 : index
    %110 = vector.load %arg0[%c0_49, %c0_50] : memref<4x128xf32, #tpu.memory_space<vmem>>, vector<4x128xf32>
    %111 = vector.broadcast %106 : vector<4x1xf32> to vector<4x128xf32>
    %112 = arith.mulf %82, %111 : vector<4x128xf32>
    %113 = vector.broadcast %109 : vector<4x1xf32> to vector<4x128xf32>
    %114 = arith.addf %113, %110 : vector<4x128xf32>
    %115 = arith.addf %112, %114 : vector<4x128xf32>
    %cst_51 = arith.constant 0.000000e+00 : f32
    %116 = vector.broadcast %cst_51 : f32 to vector<4x128xf32>
    %117 = arith.maximumf %115, %116 : vector<4x128xf32>
    %c0_52 = arith.constant 0 : index
    %c0_53 = arith.constant 0 : index
    %118 = vector.load %arg7[%c0_52, %c0_53] : memref<4x128xf32, #tpu.memory_space<vmem>>, vector<4x128xf32>
    tpu.vector_store %arg7[%c0_52, %c0_53], %117 {strides = array<i32>} : memref<4x128xf32, #tpu.memory_space<vmem>>, vector<4x128xf32>,
    return
  }
}

</mosaic_0001>

<llo_original>
// kernel: tpu_custom_call.1
$region0: #{tpu_custom_call.1}
  #allocation0 [shape = 'u32[]', space=smem, size = 0x4, offset = 0x4, fixed_abs, tag = 'smem constant byte address 0x4 - core index']
  #allocation1 [shape = 'u32[144,128]{1,0:T(1,128)}', space=vmem, size = 0x12000, scoped, tag = 'internal scratch']
  #allocation2 [shape = 'f32[12,128]{1,0:T(8,128)}', space=vmem, size = 0x2000, scoped, tag = 'scratch operand']
  #allocation3 [shape = 'f32[12,128]{1,0:T(8,128)}', space=vmem, size = 0x2000, scoped, tag = 'scratch operand']
  %s0 = inlined_call_operand.vmem [shape: f32[4,128], index: 0, kind: input, shape index: {}]
  %s1 = inlined_call_operand.vmem [shape: f32[4,12], index: 1, kind: input, shape index: {}]
  %s2 = inlined_call_operand.vmem [shape: f32[4,1], index: 2, kind: input, shape index: {}]
  %s3 = inlined_call_operand.vmem [shape: f32[4,1], index: 3, kind: input, shape index: {}]
  %s4 = inlined_call_operand.vmem [shape: f32[4,12], index: 4, kind: input, shape index: {}]
  %s5 = inlined_call_operand.vmem [shape: f32[4,1], index: 5, kind: input, shape index: {}]
  %s6 = inlined_call_operand.vmem [shape: f32[4,1], index: 6, kind: input, shape index: {}]
  %s7 = inlined_call_operand.hbm [shape: f32[4,128], index: 7, kind: output, shape index: {}]
  %s8 = sld [smem:[#allocation0]]
  $region38: #{tpu_custom_call.1} parent=0
    _
  %s10 = ssub.s32 1, %s8
  %s11 = scalar_select 0, %s10, %s8
  $region1: #{tpu_custom_call.1} parent=0
    #allocation4 [shape = 'u8[2048]{0}', space=vmem, size = 0x800, scoped, tag = 'output window, operand 0, single buffered']
    #allocation5 [shape = 's32[1]{0}', space=sflag, size = 0x4, scoped, tag = 'scoped memory for tpu_custom_call.1']
    %12 = vsyncpa [#allocation5], 0
    // Predicated region
    $region2: #{tpu_custom_call.1} parent=1 // pred_check
      _
    $region3: #{tpu_custom_call.1} parent=1 // pred_check_branch
      %14 = sbr.rel (0) target = $region5
    $region4: #{tpu_custom_call.1} parent=1 // pred_region
      _
    $region5: #{tpu_custom_call.1} parent=1 // pred_fallthru
      _
    // Predicated region
    $region6: #{tpu_custom_call.1} parent=1 // pred_check
      _
    $region7: #{tpu_custom_call.1} parent=1 // pred_check_branch
      %16 = sbr.rel (0) target = $region9
    $region8: #{tpu_custom_call.1} parent=1 // pred_region
      _
    $region9: #{tpu_custom_call.1} parent=1 // pred_fallthru
      _
    // Predicated region
    $region10: #{tpu_custom_call.1} parent=1 // pred_check
      _
    $region11: #{tpu_custom_call.1} parent=1 // pred_check_branch
      %18 = sbr.rel (0) target = $region13
    $region12: #{tpu_custom_call.1} parent=1 // pred_region
      _
    $region13: #{tpu_custom_call.1} parent=1 // pred_fallthru
      _
    // Predicated region
    $region14: #{tpu_custom_call.1} parent=1 // pred_check
      _
    $region15: #{tpu_custom_call.1} parent=1 // pred_check_branch
      %20 = sbr.rel (0) target = $region17
    $region16: #{tpu_custom_call.1} parent=1 // pred_region
      _
    $region17: #{tpu_custom_call.1} parent=1 // pred_fallthru
      _
    // Predicated region
    $region18: #{tpu_custom_call.1} parent=1 // pred_check
      _
    $region19: #{tpu_custom_call.1} parent=1 // pred_check_branch
      %22 = sbr.rel (0) target = $region21
    $region20: #{tpu_custom_call.1} parent=1 // pred_region
      _
    $region21: #{tpu_custom_call.1} parent=1 // pred_fallthru
      _
    // Predicated region
    $region22: #{tpu_custom_call.1} parent=1 // pred_check
      _
    $region23: #{tpu_custom_call.1} parent=1 // pred_check_branch
      %24 = sbr.rel (0) target = $region25
    $region24: #{tpu_custom_call.1} parent=1 // pred_region
      _
    $region25: #{tpu_custom_call.1} parent=1 // pred_fallthru
      _
    // Predicated region
    $region26: #{tpu_custom_call.1} parent=1 // pred_check
      _
    $region27: #{tpu_custom_call.1} parent=1 // pred_check_branch
      %26 = sbr.rel (0) target = $region29
    $region28: #{tpu_custom_call.1} parent=1 // pred_region
      _
    $region29: #{tpu_custom_call.1} parent=1 // pred_fallthru
      _
    %v27 = vlaneseq
    %v28 = vand.u32 %v27, 127
    %vm29 = vcmp.lt.s32.totalorder %v28, 0
    %v30 = vsub.s32 0, %v28
    %v31 = vsel %vm29, %v30, %v28
    %v32 = vshrl.u32 %v31, 4
    %v33 = vand.u32 %v31, 15
    %v34 = vsub.s32 0, %v33
    %v35 = vsel %vm29, %v34, %v33
    %vm36 = vcmp.ne.s32.totalorder %v35, 0
    %vm37 = vcmp.lt.s32.totalorder %v35, 0
    %vm38 = vmand %vm37, %vm36
    %v39 = vadd.s32 %v35, 16
    %v40 = vsel %vm38, %v39, %v35
    %vm41 = vcmp.ne.s32.totalorder %v40, 0
    %v42 = vsel %vm41, 1, 0
    %v43 = vcvt.s32.f32 %v42
    %vm44 = vcmp.ne.s32.totalorder %v40, 15
    %v45 = vsel %vm44, 1, 0
    %v46 = vcvt.s32.f32 %v45
    %v47 = vld [vmem:[%s0] sm:$0xf]
    %48 = vrot.lane.b32.xlu0 %v47, 1
    %v49 = vpop.permute.xlu0 %48
    %v50 = vmul.f32 %v49, %v43
    %51 = vst [vmem:[#allocation2] sm:$0xf] %v50
    %52 = vst [vmem:[#allocation2 + $0x4] sm:$0xf] %v47
    %53 = vrot.lane.b32.xlu0 %v47, 127
    %v54 = vpop.permute.xlu0 %53
    %v55 = vmul.f32 %v54, %v46
    %56 = vst [vmem:[#allocation2 + $0x8] sm:$0xf] %v55
    %v57 = vld [vmem:[%s1] sm:$0xf]
    %v58 = vld [vmem:[#allocation2] sm:$0xff]
    %v59 = vld [vmem:[#allocation2 + $0x8] sm:$0xf]
    %vm60 = vcmask 97280
    %v62 = vsel %vm60, %v57, 0
    %vm64 = vcmask 1043456
    %v66 = vsel %vm64, %v59, 0
    %68 = vmatprep.subr.mxu0 0.0
    %69 = vmatpush1.msra.mxu0 %v58
    %70 = vmatprep.subr.mxu0 0.0
    %71 = vmatpush1.msra.mxu0 %v66
    %72 = vmatprep.subr.mxu0 0.0
    %73 = vmatpush1.msra.mxu0 0.0
    %74 = vmatprep.subr.mxu0 0.0
    %75 = vmatpush1.msra.mxu0 0.0
    %76 = vmatprep.subr.mxu0 0.0
    %77 = vmatpush1.msra.mxu0 0.0
    %78 = vmatprep.subr.mxu0 0.0
    %79 = vmatpush1.msra.mxu0 0.0
    %80 = vmatprep.subr.mxu0 0.0
    %81 = vmatpush1.msra.mxu0 0.0
    %82 = vmatprep.subr.mxu0 0.0
    %83 = vmatpush1.msra.mxu0 0.0
    %84 = vmatprep.subr.mxu0 0.0
    %85 = vmatpush1.msra.mxu0 0.0
    %86 = vmatprep.subr.mxu0 0.0
    %87 = vmatpush1.msra.mxu0 0.0
    %88 = vmatprep.subr.mxu0 0.0
    %89 = vmatpush1.msra.mxu0 0.0
    %90 = vmatprep.subr.mxu0 0.0
    %91 = vmatpush1.msra.mxu0 0.0
    %92 = vmatprep.subr.mxu0 0.0
    %93 = vmatpush1.msra.mxu0 0.0
    %94 = vmatprep.subr.mxu0 0.0
    %95 = vmatpush1.msra.mxu0 0.0
    %96 = vmatprep.subr.mxu0 0.0
    %97 = vmatpush1.msra.mxu0 0.0
    %98 = vmatprep.subr.mxu0 0.0
    %99 = vmatpush1.msra.mxu0 0.0
    %100 = vmatprep.subr.mxu0 0.0
    %101 = vmatpush1.msra.mxu0 0.0
    %102 = vmatprep.subr.mxu0 0.0
    %103 = vmatpush1.msra.mxu0 0.0
    %104 = vmatprep.subr.mxu0 0.0
    %105 = vmatpush1.msra.mxu0 0.0
    %106 = vmatprep.subr.mxu0 0.0
    %107 = vmatpush1.msra.mxu0 0.0
    %108 = vmatprep.subr.mxu0 0.0
    %109 = vmatpush1.msra.mxu0 0.0
    %110 = vmatprep.subr.mxu0 0.0
    %111 = vmatpush1.msra.mxu0 0.0
    %112 = vmatprep.subr.mxu0 0.0
    %113 = vmatpush1.msra.mxu0 0.0
    %114 = vmatprep.subr.mxu0 0.0
    %115 = vmatpush1.msra.mxu0 0.0
    %116 = vmatprep.subr.mxu0 0.0
    %117 = vmatpush1.msra.mxu0 0.0
    %118 = vmatprep.subr.mxu0 0.0
    %119 = vmatpush1.msra.mxu0 0.0
    %120 = vmatprep.subr.mxu0 0.0
    %121 = vmatpush1.msra.mxu0 0.0
    %122 = vmatprep.subr.mxu0 0.0
    %123 = vmatpush1.msra.mxu0 0.0
    %124 = vmatprep.subr.mxu0 0.0
    %125 = vmatpush1.msra.mxu0 0.0
    %126 = vmatprep.subr.mxu0 0.0
    %127 = vmatpush1.msra.mxu0 0.0
    %128 = vmatprep.subr.mxu0 0.0
    %129 = vmatpush1.msra.mxu0 0.0
    %130 = vmatprep.subr.mxu0 0.0
    %131 = vmatpush1.msra.mxu0 0.0
    %132 = vmatprep.mubr.f32.mxu0 0.0
    %133 = vmatmul.mubr.f32.gmra.mrb[0].mxu0 %v62
    %v134 = vpop.f32.mrb[0].mxu0
    %v135 = vadd.f32 0.0, %v134
    %v136 = vpop.f32.mrb[0].mxu0
    %137 = vdwg.mxu0
    %vm138 = vcmp.lt.s32.totalorder %v28, 32
    %v139 = vsel %vm138, 1, 0
    %v140 = vcvt.s32.f32 %v139
    %v141 = vmul.f32 %v135, %v140
    %v142 = vsel %vm64, %v141, 0.0
    %143 = vadd.xlane.f32.xlu0 %v142
    %v144 = vpop.xlane.xlu0 %143
    %v145 = vmul.f32 %v141, %v141
    %v146 = vsel %vm64, %v145, 0.0
    %147 = vadd.xlane.f32.xlu0 %v146
    %v148 = vpop.xlane.xlu0 %147
    %v149 = vmul.f32 %v144, 0.03125
    %v150 = vmul.f32 %v148, 0.03125
    %v151 = vmul.f32 %v149, %v149
    %v152 = vsub.f32 %v150, %v151
    %v153 = vmax.f32 %v152, 0.0
    %v154 = vadd.f32 %v153, 1e-05
    %v155 = vrsqrt.pop %v154
    %v156 = vld [vmem:[%s2] sm:$0xf]
    %v157 = vmul.f32 %v155, %v156
    %v158 = vld [vmem:[%s3] sm:$0xf]
    %v159 = vmul.f32 %v149, %v157
    %v160 = vsub.f32 %v158, %v159
    %162 = vset.pattern.permute.xlu0 0
    %163 = vperm.xlu0 %162, %v157
    %v164 = vpop.permute.xlu0 %163
    %v166 = vmul.f32 %v135, %v164
    %168 = vset.pattern.permute.xlu0 0
    %169 = vperm.xlu0 %168, %v160
    %v170 = vpop.permute.xlu0 %169
    %v172 = vadd.f32 %v166, %v170
    %v173 = vmax.f32 %v172, 0.0
    %174 = vrot.lane.b32.xlu0 %v173, 1
    %v175 = vpop.permute.xlu0 %174
    %v176 = vmul.f32 %v175, %v43
    %177 = vst [vmem:[#allocation3] sm:$0xf] %v176
    %178 = vst [vmem:[#allocation3 + $0x4] sm:$0xf] %v173
    %179 = vrot.lane.b32.xlu0 %v173, 127
    %v180 = vpop.permute.xlu0 %179
    %v181 = vmul.f32 %v180, %v46
    %182 = vst [vmem:[#allocation3 + $0x8] sm:$0xf] %v181
    %v183 = vld [vmem:[%s4] sm:$0xf]
    %v184 = vld [vmem:[#allocation3] sm:$0xff]
    %v185 = vld [vmem:[#allocation3 + $0x8] sm:$0xf]
    %v187 = vsel %vm60, %v183, 0
    %v190 = vsel %vm64, %v185, 0
    %192 = vmatprep.subr.mxu0 0.0
    %193 = vmatpush1.msra.mxu0 %v184
    %194 = vmatprep.subr.mxu0 0.0
    %195 = vmatpush1.msra.mxu0 %v190
    %196 = vmatprep.subr.mxu0 0.0
    %197 = vmatpush1.msra.mxu0 0.0
    %198 = vmatprep.subr.mxu0 0.0
    %199 = vmatpush1.msra.mxu0 0.0
    %200 = vmatprep.subr.mxu0 0.0
    %201 = vmatpush1.msra.mxu0 0.0
    %202 = vmatprep.subr.mxu0 0.0
    %203 = vmatpush1.msra.mxu0 0.0
    %204 = vmatprep.subr.mxu0 0.0
    %205 = vmatpush1.msra.mxu0 0.0
    %206 = vmatprep.subr.mxu0 0.0
    %207 = vmatpush1.msra.mxu0 0.0
    %208 = vmatprep.subr.mxu0 0.0
    %209 = vmatpush1.msra.mxu0 0.0
    %210 = vmatprep.subr.mxu0 0.0
    %211 = vmatpush1.msra.mxu0 0.0
    %212 = vmatprep.subr.mxu0 0.0
    %213 = vmatpush1.msra.mxu0 0.0
    %214 = vmatprep.subr.mxu0 0.0
    %215 = vmatpush1.msra.mxu0 0.0
    %216 = vmatprep.subr.mxu0 0.0
    %217 = vmatpush1.msra.mxu0 0.0
    %218 = vmatprep.subr.mxu0 0.0
    %219 = vmatpush1.msra.mxu0 0.0
    %220 = vmatprep.subr.mxu0 0.0
    %221 = vmatpush1.msra.mxu0 0.0
    %222 = vmatprep.subr.mxu0 0.0
    %223 = vmatpush1.msra.mxu0 0.0
    %224 = vmatprep.subr.mxu0 0.0
    %225 = vmatpush1.msra.mxu0 0.0
    %226 = vmatprep.subr.mxu0 0.0
    %227 = vmatpush1.msra.mxu0 0.0
    %228 = vmatprep.subr.mxu0 0.0
    %229 = vmatpush1.msra.mxu0 0.0
    %230 = vmatprep.subr.mxu0 0.0
    %231 = vmatpush1.msra.mxu0 0.0
    %232 = vmatprep.subr.mxu0 0.0
    %233 = vmatpush1.msra.mxu0 0.0
    %234 = vmatprep.subr.mxu0 0.0
    %235 = vmatpush1.msra.mxu0 0.0
    %236 = vmatprep.subr.mxu0 0.0
    %237 = vmatpush1.msra.mxu0 0.0
    %238 = vmatprep.subr.mxu0 0.0
    %239 = vmatpush1.msra.mxu0 0.0
    %240 = vmatprep.subr.mxu0 0.0
    %241 = vmatpush1.msra.mxu0 0.0
    %242 = vmatprep.subr.mxu0 0.0
    %243 = vmatpush1.msra.mxu0 0.0
    %244 = vmatprep.subr.mxu0 0.0
    %245 = vmatpush1.msra.mxu0 0.0
    %246 = vmatprep.subr.mxu0 0.0
    %247 = vmatpush1.msra.mxu0 0.0
    %248 = vmatprep.subr.mxu0 0.0
    %249 = vmatpush1.msra.mxu0 0.0
    %250 = vmatprep.subr.mxu0 0.0
    %251 = vmatpush1.msra.mxu0 0.0
    %252 = vmatprep.subr.mxu0 0.0
    %253 = vmatpush1.msra.mxu0 0.0
    %254 = vmatprep.subr.mxu0 0.0
    %255 = vmatpush1.msra.mxu0 0.0
    %256 = vmatprep.mubr.f32.mxu0 0.0
    %257 = vmatmul.mubr.f32.gmra.mrb[0].mxu0 %v187
    %v258 = vpop.f32.mrb[0].mxu0
    %v259 = vadd.f32 0.0, %v258
    %v260 = vpop.f32.mrb[0].mxu0
    %261 = vdwg.mxu0
    %v262 = vmul.f32 %v259, %v140
    %v263 = vsel %vm64, %v262, 0.0
    %264 = vadd.xlane.f32.xlu0 %v263
    %v265 = vpop.xlane.xlu0 %264
    %v266 = vmul.f32 %v262, %v262
    %v267 = vsel %vm64, %v266, 0.0
    %268 = vadd.xlane.f32.xlu0 %v267
    %v269 = vpop.xlane.xlu0 %268
    %v270 = vmul.f32 %v265, 0.03125
    %v271 = vmul.f32 %v269, 0.03125
    %v272 = vmul.f32 %v270, %v270
    %v273 = vsub.f32 %v271, %v272
    %v274 = vmax.f32 %v273, 0.0
    %v275 = vadd.f32 %v274, 1e-05
    %v276 = vrsqrt.pop %v275
    %v277 = vld [vmem:[%s5] sm:$0xf]
    %v278 = vmul.f32 %v276, %v277
    %v279 = vld [vmem:[%s6] sm:$0xf]
    %v280 = vmul.f32 %v270, %v278
    %v281 = vsub.f32 %v279, %v280
    %v282 = vld [vmem:[%s0] sm:$0xf]
    %284 = vset.pattern.permute.xlu0 0
    %285 = vperm.xlu0 %284, %v278
    %v286 = vpop.permute.xlu0 %285
    %v288 = vmul.f32 %v259, %v286
    %290 = vset.pattern.permute.xlu0 0
    %291 = vperm.xlu0 %290, %v281
    %v292 = vpop.permute.xlu0 %291
    %v294 = vadd.f32 %v292, %v282
    %v295 = vadd.f32 %v288, %v294
    %v296 = vmax.f32 %v295, 0.0
    %297 = vst [vmem:[#allocation4] sm:$0xf] %v296
    // Predicated region
    $region30: #{tpu_custom_call.1} parent=1 // pred_check
      _
    $region31: #{tpu_custom_call.1} parent=1 // pred_check_branch
      %299 = sbr.rel (0) target = $region33
    $region32: #{tpu_custom_call.1} parent=1 // pred_region
      %s301 = ssub.s32 64, 64
      %302 = vsyncadd [#allocation5], %s301
      %s304 = sshll.u32 [#allocation4], 4
      %s305 = int_to_ptr.vmem [resolvable:$true] %s304
      %307 = dma.vmem_to_hbm [thread:$0]  %s305, 64, %s7, [#allocation5]
    $region33: #{tpu_custom_call.1} parent=1 // pred_fallthru
      _
    // Predicated region
    $region34: #{tpu_custom_call.1} parent=1 // pred_check
      _
    $region35: #{tpu_custom_call.1} parent=1 // pred_check_branch
      %309 = sbr.rel (0) target = $region37
    $region36: #{tpu_custom_call.1} parent=1 // pred_region
      %310 = dma.done [#allocation5], 64
    $region37: #{tpu_custom_call.1} parent=1 // pred_fallthru
      _
    %311 = vsyncpa [#allocation5], 1

</llo_original>
